<compile_context>
chip_gen: v6e
topology: v6e:2x2x1
jax: 0.10.0
libtpu: 0.0.40
codegen_flags: <defaults>
</compile_context>

<pallas_src>
import functools

import jax
import jax.numpy as jnp
from jax.experimental import pallas as pl
from jax.experimental.pallas import tpu as pltpu

LN_EPS = 1e-5
TOKEN_SELF_ATTN_VALUE = -5e4   # reformer_pytorch constant
NEG_MASK = -1e9                # finite causal-mask value
VMEM_LIMIT = 48 * 1024 * 1024  # safe on v7x (64 MiB phys), ample on v5e/v6e


def _layer_norm_f32(x, g, b):
    x = x.astype(jnp.float32)
    mu = jnp.mean(x, axis=-1, keepdims=True)
    var = jnp.mean(jnp.square(x - mu), axis=-1, keepdims=True)
    return (x - mu) * jax.lax.rsqrt(var + LN_EPS) * g.astype(jnp.float32) \
        + b.astype(jnp.float32)


def _pick_seq_tile(n, cap):
    """Largest multiple-of-8 divisor of n that is <= cap (or n itself)."""
    if n % 8 != 0:
        return n
    t = min(cap - cap % 8, n)
    while n % t != 0:
        t -= 8
    return t


def _pick_lane_tile(n, cap):
    """Largest multiple-of-128 divisor of n that is <= cap (or n itself)."""
    if n % 128 != 0:
        return n
    t = min(cap - cap % 128, n)
    if t < 128:
        return n
    while n % t != 0:
        t -= 128
    return t


# ---------------------------------------------------------------------------
# Kernel 1: per-layer QKV projection (PreNorm fused), head-major outputs.
#   grid = (B, N//TN, H).  Outputs q (pre-scaled), k (l2-normalized), v,
#   each (B, H, N, dh) in compute_dtype.  LN(x2) computed once per seq tile
#   (scratch shared across the head axis -> head axis is "arbitrary").
# ---------------------------------------------------------------------------
def _qkv_kernel(x_ref, g_ref, b_ref, wqk_ref, wv_ref,
                q_ref, k_ref, v_ref, xn_sc, *, scale, cdt):
    h = pl.program_id(2)

    @pl.when(h == 0)
    def _():
        xn_sc[...] = _layer_norm_f32(x_ref[0], g_ref[...], b_ref[...])

    xn = xn_sc[...].astype(cdt)
    qk = jnp.dot(xn, wqk_ref[0], preferred_element_type=jnp.float32)   # (tn, dh)
    v = jnp.dot(xn, wv_ref[0], preferred_element_type=jnp.float32)     # (tn, dh)
    # shared-QK keys: F.normalize(qk, 2, -1)  (rsqrt -> EUP, no divide)
    inv = jax.lax.rsqrt(jnp.maximum(jnp.sum(qk * qk, axis=-1, keepdims=True),
                                    1e-12))
    # fold the dh**-0.5 score scale into q here (saves a (TQ,TKV) mul per tile)
    q_ref[0, 0] = (qk * scale).astype(q_ref.dtype)
    k_ref[0, 0] = (qk * inv).astype(k_ref.dtype)
    v_ref[0, 0] = v.astype(v_ref.dtype)


def qkv_project(x, p, n_heads, *, tn=None, compute_dtype=jnp.bfloat16):
    b, n, d = x.shape
    dh = d // n_heads
    tn = tn or _pick_seq_tile(n, 256)
    scale = float(dh) ** -0.5

    # head-major, bf16 weights prepared once in the wrapper (cheap XLA ops)
    wqk_h = p["wqk"].reshape(d, n_heads, dh).transpose(1, 0, 2).astype(compute_dtype)
    wv_h = p["wv"].reshape(d, n_heads, dh).transpose(1, 0, 2).astype(compute_dtype)

    kernel = functools.partial(_qkv_kernel, scale=scale, cdt=compute_dtype)
    out_shape = tuple(jax.ShapeDtypeStruct((b, n_heads, n, dh), compute_dtype)
                      for _ in range(3))
    return pl.pallas_call(
        kernel,
        out_shape=out_shape,
        grid_spec=pltpu.PrefetchScalarGridSpec(
            num_scalar_prefetch=0,
            grid=(b, n // tn, n_heads),
            in_specs=[
                pl.BlockSpec((1, tn, d), lambda bb, ni, h: (bb, ni, 0)),   # x2 tile
                pl.BlockSpec((1, d), lambda bb, ni, h: (0, 0)),            # ln_g
                pl.BlockSpec((1, d), lambda bb, ni, h: (0, 0)),            # ln_b
                pl.BlockSpec((1, d, dh), lambda bb, ni, h: (h, 0, 0)),     # wqk head
                pl.BlockSpec((1, d, dh), lambda bb, ni, h: (h, 0, 0)),     # wv head
            ],
            out_specs=[
                pl.BlockSpec((1, 1, tn, dh), lambda bb, ni, h: (bb, h, ni, 0)),
                pl.BlockSpec((1, 1, tn, dh), lambda bb, ni, h: (bb, h, ni, 0)),
                pl.BlockSpec((1, 1, tn, dh), lambda bb, ni, h: (bb, h, ni, 0)),
            ],
            scratch_shapes=[pltpu.VMEM((tn, d), jnp.float32)]),   # LN(x2 tile)
        compiler_params=pltpu.CompilerParams(
            dimension_semantics=("parallel", "parallel", "arbitrary"),
            vmem_limit_bytes=VMEM_LIMIT),
    )(x, p["ln_g"], p["ln_b"], wqk_h, wv_h)


# ---------------------------------------------------------------------------
# Kernel 2: flash-style causal shared-QK attention core + out-projection
#           + fused reversible residual.
#   grid = (B, N//TQ, H, N//TKV); online softmax over kv tiles; per-head
#   out-projection accumulated across the head axis; kv index_map clamped to
#   the causal boundary so future tiles issue no DMA.
# ---------------------------------------------------------------------------
def _attn_kernel(x1_ref, q_ref, k_ref, v_ref, wo_ref, bo_ref, o_ref,
                 m_sc, l_sc, acc_sc, out_sc, *, tq, tkv, cdt):
    qi = pl.program_id(1)
    h = pl.program_id(2)
    ki = pl.program_id(3)
    nh = pl.num_programs(2)
    nk = pl.num_programs(3)

    @pl.when(jnp.logical_and(h == 0, ki == 0))
    def _():
        out_sc[...] = jnp.zeros_like(out_sc)

    @pl.when(ki == 0)
    def _():
        m_sc[...] = jnp.full_like(m_sc, -jnp.inf)
        l_sc[...] = jnp.zeros_like(l_sc)
        acc_sc[...] = jnp.zeros_like(acc_sc)

    q_start = qi * tq
    k_start = ki * tkv
    has_past = k_start <= q_start + (tq - 1)        # tile has >=1 visible key
    crosses_diag = k_start + (tkv - 1) >= q_start   # tile needs masking

    def scores():
        # (TQ, TKV) = q @ k^T ; q already carries the dh**-0.5 scale.
        return jax.lax.dot_general(
            q_ref[0, 0], k_ref[0, 0], (((1,), (1,)), ((), ())),
            preferred_element_type=jnp.float32)

    def online_update(s):
        m_new = jnp.maximum(m_sc[...], jnp.max(s, axis=-1, keepdims=True))
        alpha = jnp.exp(m_sc[...] - m_new)
        p = jnp.exp(s - m_new)
        l_sc[...] = alpha * l_sc[...] + jnp.sum(p, axis=-1, keepdims=True)
        acc_sc[...] = alpha * acc_sc[...] + jnp.dot(
            p.astype(cdt), v_ref[0, 0], preferred_element_type=jnp.float32)
        m_sc[...] = m_new

    # Diagonal-crossing tiles: apply causal + self masks.
    @pl.when(jnp.logical_and(has_past, crosses_diag))
    def _():
        s = scores()
        row = q_start + jax.lax.broadcasted_iota(jnp.int32, (tq, tkv), 0)
        col = k_start + jax.lax.broadcasted_iota(jnp.int32, (tq, tkv), 1)
        s = jnp.where(col > row, jnp.float32(NEG_MASK), s)
        s = jnp.where(col == row, jnp.float32(TOKEN_SELF_ATTN_VALUE), s)
        online_update(s)

    # Strictly-past tiles: no mask work at all.
    @pl.when(jnp.logical_and(has_past, jnp.logical_not(crosses_diag)))
    def _():
        online_update(scores())

    @pl.when(ki == nk - 1)
    def _():
        # finalize this head and accumulate its out-projection contribution
        o_h = acc_sc[...] * pl.reciprocal(l_sc[...], approx=True)   # (TQ, dh)
        out_sc[...] += jnp.dot(o_h.astype(cdt), wo_ref[0],
                               preferred_element_type=jnp.float32)

    @pl.when(jnp.logical_and(h == nh - 1, ki == nk - 1))
    def _():
        # out-projection bias + fused reversible residual: x1_new = x1 + Attn(LN(x2))
        o_ref[0] = (x1_ref[0].astype(jnp.float32) + out_sc[...]
                    + bo_ref[...].astype(jnp.float32)).astype(o_ref.dtype)


def attention_core(x_res, q, k, v, p, n_heads, *, tq=None, tkv=None,
                   compute_dtype=jnp.bfloat16):
    b, n, d = x_res.shape
    dh = d // n_heads
    tq = tq or _pick_seq_tile(n, 256)
    tkv = tkv or _pick_seq_tile(n, 128)   # 256x128 default (smaller s/p tiles)

    wo_h = p["wo"].reshape(n_heads, dh, d).astype(compute_dtype)   # (H, dh, D)

    def kv_map(bb, qi, h, ki):
        # Clamp to the causal boundary: fully-future grid steps reuse the
        # previous block index -> Pallas skips the DMA entirely.
        last = (qi * tq + tq - 1) // tkv
        return (bb, h, jnp.minimum(ki, last), 0)

    kernel = functools.partial(_attn_kernel, tq=tq, tkv=tkv, cdt=compute_dtype)
    return pl.pallas_call(
        kernel,
        out_shape=jax.ShapeDtypeStruct((b, n, d), x_res.dtype),
        grid_spec=pltpu.PrefetchScalarGridSpec(
            num_scalar_prefetch=0,
            grid=(b, n // tq, n_heads, n // tkv),
            in_specs=[
                pl.BlockSpec((1, tq, d), lambda bb, qi, h, ki: (bb, qi, 0)),        # x1 residual
                pl.BlockSpec((1, 1, tq, dh), lambda bb, qi, h, ki: (bb, h, qi, 0)), # q
                pl.BlockSpec((1, 1, tkv, dh), kv_map),                              # k
                pl.BlockSpec((1, 1, tkv, dh), kv_map),                              # v
                pl.BlockSpec((1, dh, d), lambda bb, qi, h, ki: (h, 0, 0)),          # wo head
                pl.BlockSpec((1, d), lambda bb, qi, h, ki: (0, 0)),                 # bo
            ],
            out_specs=pl.BlockSpec((1, tq, d), lambda bb, qi, h, ki: (bb, qi, 0)),
            scratch_shapes=[
                pltpu.VMEM((tq, 1), jnp.float32),    # m
                pltpu.VMEM((tq, 1), jnp.float32),    # l
                pltpu.VMEM((tq, dh), jnp.float32),   # acc (this head)
                pltpu.VMEM((tq, d), jnp.float32),    # cross-head output acc
            ]),
        compiler_params=pltpu.CompilerParams(
            # head / kv axes accumulate into scratch -> must stay "arbitrary"
            dimension_semantics=("parallel", "parallel", "arbitrary", "arbitrary"),
            vmem_limit_bytes=VMEM_LIMIT),
    )(x_res, q, k, v, wo_h, p["bo"])


# ---------------------------------------------------------------------------
# Kernel 3: fused residual + PreNorm + FFN (Linear -> GELU -> Linear)
#   grid = (B, N//TN, d_ff//TKF); (TN, D) f32 accumulator over d_ff tiles.
# ---------------------------------------------------------------------------
def _ffn_kernel(xres_ref, x_ref, g_ref, b_ref, w1_ref, b1_ref, w2_ref, b2_ref,
                o_ref, xn_sc, acc_sc, *, cdt):
    ki = pl.program_id(2)

    @pl.when(ki == 0)
    def _():
        xn_sc[...] = _layer_norm_f32(x_ref[0], g_ref[...], b_ref[...])
        acc_sc[...] = jnp.zeros_like(acc_sc)

    hid = jnp.dot(xn_sc[...].astype(cdt), w1_ref[...],
                  preferred_element_type=jnp.float32) \
        + b1_ref[...].astype(jnp.float32)
    hid = jax.nn.gelu(hid, approximate=False)        # nn.GELU() (exact erf form)
    acc_sc[...] += jnp.dot(hid.astype(cdt), w2_ref[...],
                           preferred_element_type=jnp.float32)

    @pl.when(ki == pl.num_programs(2) - 1)
    def _():
        # second-linear bias + fused residual: x2_new = x2 + FF(LN(x1))
        o_ref[0] = (xres_ref[0].astype(jnp.float32) + acc_sc[...]
                    + b2_ref[...].astype(jnp.float32)).astype(o_ref.dtype)


def feed_forward(x_res, x, p, *, tn=None, tkf=None, compute_dtype=jnp.bfloat16):
    b, n, d = x.shape
    d_ff = p["w1"].shape[1]
    tn = tn or _pick_seq_tile(n, 512)        # larger seq tile: fewer W1/W2 re-reads
    tkf = tkf or _pick_lane_tile(d_ff, 512)

    # bf16 weights cast once in the wrapper (halves weight HBM bytes)
    w1 = p["w1"].astype(compute_dtype)
    w2 = p["w2"].astype(compute_dtype)

    kernel = functools.partial(_ffn_kernel, cdt=compute_dtype)
    return pl.pallas_call(
        kernel,
        out_shape=jax.ShapeDtypeStruct((b, n, d), x.dtype),
        grid_spec=pltpu.PrefetchScalarGridSpec(
            num_scalar_prefetch=0,
            grid=(b, n // tn, d_ff // tkf),
            in_specs=[
                pl.BlockSpec((1, tn, d), lambda bb, ni, ki: (bb, ni, 0)),   # x2 residual
                pl.BlockSpec((1, tn, d), lambda bb, ni, ki: (bb, ni, 0)),   # x1 (LN input)
                pl.BlockSpec((1, d), lambda bb, ni, ki: (0, 0)),            # ln_g
                pl.BlockSpec((1, d), lambda bb, ni, ki: (0, 0)),            # ln_b
                pl.BlockSpec((d, tkf), lambda bb, ni, ki: (0, ki)),         # w1 tile
                pl.BlockSpec((1, tkf), lambda bb, ni, ki: (0, ki)),         # b1 tile
                pl.BlockSpec((tkf, d), lambda bb, ni, ki: (ki, 0)),         # w2 tile
                pl.BlockSpec((1, d), lambda bb, ni, ki: (0, 0)),            # b2
            ],
            out_specs=pl.BlockSpec((1, tn, d), lambda bb, ni, ki: (bb, ni, 0)),
            scratch_shapes=[
                pltpu.VMEM((tn, d), jnp.float32),    # LN(x1 tile)
                pltpu.VMEM((tn, d), jnp.float32),    # output accumulator
            ]),
        compiler_params=pltpu.CompilerParams(
            dimension_semantics=("parallel", "parallel", "arbitrary"),
            vmem_limit_bytes=VMEM_LIMIT),
    )(x_res, x, p["ln_g"], p["ln_b"], w1, p["b1"], w2, p["b2"])


# ---------------------------------------------------------------------------
# Kernel 4: merge reversible streams + mean over sequence (tiled accumulation)
# ---------------------------------------------------------------------------
def _pool_kernel(x1_ref, x2_ref, o_ref, acc_sc, *, seq_len):
    ni = pl.program_id(1)

    @pl.when(ni == 0)
    def _():
        acc_sc[...] = jnp.zeros_like(acc_sc)

    acc_sc[...] += jnp.sum(x1_ref[0].astype(jnp.float32)
                           + x2_ref[0].astype(jnp.float32),
                           axis=0, keepdims=True)

    @pl.when(ni == pl.num_programs(1) - 1)
    def _():
        o_ref[0] = (acc_sc[...] * jnp.float32(0.5 / seq_len)).astype(o_ref.dtype)


def pool(x1, x2, *, tn=None):
    b, n, d = x1.shape
    tn = tn or _pick_seq_tile(n, 512)
    out = pl.pallas_call(
        functools.partial(_pool_kernel, seq_len=n),
        out_shape=jax.ShapeDtypeStruct((b, 1, d), x1.dtype),
        grid_spec=pltpu.PrefetchScalarGridSpec(
            num_scalar_prefetch=0,
            grid=(b, n // tn),
            in_specs=[
                pl.BlockSpec((1, tn, d), lambda bb, ni: (bb, ni, 0)),
                pl.BlockSpec((1, tn, d), lambda bb, ni: (bb, ni, 0)),
            ],
            out_specs=pl.BlockSpec((1, 1, d), lambda bb, ni: (bb, 0, 0)),
            scratch_shapes=[pltpu.VMEM((1, d), jnp.float32)]),
        compiler_params=pltpu.CompilerParams(
            dimension_semantics=("parallel", "arbitrary")),
    )(x1, x2)
    # torch.mean(out, dim=1).reshape(1, -1, hidden_size)
    return out.reshape(1, b, d)


# ---------------------------------------------------------------------------
# Module forward + deterministic parameter init
# ---------------------------------------------------------------------------
def init_params(key, depth, d, d_ff_mult=4, scale=0.02):
    layers = []
    for _ in range(depth):
        key, k0, k1, k2, k3, k4 = jax.random.split(key, 6)
        attn = dict(
            ln_g=jnp.ones((1, d), jnp.float32),
            ln_b=jnp.zeros((1, d), jnp.float32),
            wqk=scale * jax.random.normal(k0, (d, d), jnp.float32),
            wv=scale * jax.random.normal(k1, (d, d), jnp.float32),
            wo=scale * jax.random.normal(k2, (d, d), jnp.float32),
            bo=jnp.zeros((1, d), jnp.float32),
        )
        ff = dict(
            ln_g=jnp.ones((1, d), jnp.float32),
            ln_b=jnp.zeros((1, d), jnp.float32),
            w1=scale * jax.random.normal(k3, (d, d_ff_mult * d), jnp.float32),
            b1=jnp.zeros((1, d_ff_mult * d), jnp.float32),
            w2=scale * jax.random.normal(k4, (d_ff_mult * d, d), jnp.float32),
            b2=jnp.zeros((1, d), jnp.float32),
        )
        layers.append(dict(attn=attn, ff=ff))
    return dict(layers=layers)


def pooling_reformer_forward(x, params, *, n_heads, compute_dtype=jnp.bfloat16):
    # Reformer: duplicate into two reversible residual streams.
    x1, x2 = x, x
    for layer in params["layers"]:
        # precompute head-major Q (pre-scaled), K (l2-normalized), V once
        q, k, v = qkv_project(x2, layer["attn"], n_heads,
                              compute_dtype=compute_dtype)
        x1 = attention_core(x1, q, k, v, layer["attn"], n_heads,
                            compute_dtype=compute_dtype)   # x1 += Attn(LN(x2))
        x2 = feed_forward(x2, x1, layer["ff"],
                          compute_dtype=compute_dtype)     # x2 += FF(LN(x1))
    # mean of streams, then mean over seq dim, reshape (1, -1, hidden_size)
    return pool(x1, x2)


if __name__ == "__main__":
    B, N, D, H, DEPTH = 2, 8, 32, 4, 2   # batch, seq, hidden, heads, layers
    key = jax.random.PRNGKey(0)
    kx, kp = jax.random.split(key)
    x = jax.random.normal(kx, (B, N, D), jnp.float32)
    params = init_params(kp, DEPTH, D)

    out = pooling_reformer_forward(x, params, n_heads=H)
    out = jax.block_until_ready(out)
    assert out.shape == (1, B, D), out.shape
    assert jnp.all(jnp.isfinite(out))
    print("KERNEL_OK")
</pallas_src>

<mosaic_0001>
module attributes {stable_mosaic.version = 11 : i64} {
  func.func @_qkv_kernel(%arg0: i32, %arg1: i32, %arg2: i32, %arg3: memref<1x8x32xf32, #tpu.memory_space<vmem>>, %arg4: memref<1x32xf32, #tpu.memory_space<vmem>>, %arg5: memref<1x32xf32, #tpu.memory_space<vmem>>, %arg6: memref<1x32x8xbf16, #tpu.memory_space<vmem>>, %arg7: memref<1x32x8xbf16, #tpu.memory_space<vmem>>, %arg8: memref<1x1x8x8xbf16, #tpu.memory_space<vmem>>, %arg9: memref<1x1x8x8xbf16, #tpu.memory_space<vmem>>, %arg10: memref<1x1x8x8xbf16, #tpu.memory_space<vmem>>, %arg11: memref<8x32xf32, #tpu.memory_space<vmem>>) attributes {dimension_semantics = [#tpu.dimension_semantics<parallel>, #tpu.dimension_semantics<parallel>, #tpu.dimension_semantics<arbitrary>], iteration_bounds = array<i64: 2, 1, 4>, scalar_prefetch = 0 : i64, scratch_operands = 1 : i64, tpu.core_type = #tpu.core_type<tc>, window_params = [{transform_indices = @transform_0, window_bounds = array<i64: 1, 8, 32>}, {pipeline_mode = #tpu.pipeline_mode<synchronous>, transform_indices = @transform_1, window_bounds = array<i64: 1, 32>}, {pipeline_mode = #tpu.pipeline_mode<synchronous>, transform_indices = @transform_2, window_bounds = array<i64: 1, 32>}, {transform_indices = @transform_3, window_bounds = array<i64: 1, 32, 8>}, {transform_indices = @transform_4, window_bounds = array<i64: 1, 32, 8>}, {transform_indices = @transform_5, window_bounds = array<i64: 1, 1, 8, 8>}, {transform_indices = @transform_6, window_bounds = array<i64: 1, 1, 8, 8>}, {transform_indices = @transform_7, window_bounds = array<i64: 1, 1, 8, 8>}]} {
    %c0_i32 = arith.constant 0 : i32
    %0 = arith.cmpi eq, %arg2, %c0_i32 : i32
    %1 = arith.extui %0 : i1 to i32
    %c0_i32_0 = arith.constant 0 : i32
    %2 = arith.cmpi ne, %1, %c0_i32_0 : i32
    scf.if %2 {
      %c0_24 = arith.constant 0 : index
      %c0_25 = arith.constant 0 : index
      %c0_26 = arith.constant 0 : index
      %33 = vector.load %arg3[%c0_24, %c0_25, %c0_26] : memref<1x8x32xf32, #tpu.memory_space<vmem>>, vector<1x8x32xf32>
      %34 = vector.shape_cast %33 : vector<1x8x32xf32> to vector<8x32xf32>
      %c0_27 = arith.constant 0 : index
      %c0_28 = arith.constant 0 : index
      %35 = vector.load %arg4[%c0_27, %c0_28] : memref<1x32xf32, #tpu.memory_space<vmem>>, vector<1x32xf32>
      %c0_29 = arith.constant 0 : index
      %c0_30 = arith.constant 0 : index
      %36 = vector.load %arg5[%c0_29, %c0_30] : memref<1x32xf32, #tpu.memory_space<vmem>>, vector<1x32xf32>
      %cst_31 = arith.constant dense<0.000000e+00> : vector<8xf32>
      %37 = vector.multi_reduction <add>, %34, %cst_31 [1] : vector<8x32xf32> to vector<8xf32>
      %38 = vector.shape_cast %37 : vector<8xf32> to vector<8x1xf32>
      %cst_32 = arith.constant 3.200000e+01 : f32
      %39 = vector.broadcast %cst_32 : f32 to vector<8x1xf32>
      %40 = arith.divf %38, %39 : vector<8x1xf32>
      %41 = vector.broadcast %40 : vector<8x1xf32> to vector<8x32xf32>
      %42 = arith.subf %34, %41 : vector<8x32xf32>
      %43 = arith.mulf %42, %42 : vector<8x32xf32>
      %cst_33 = arith.constant dense<0.000000e+00> : vector<8xf32>
      %44 = vector.multi_reduction <add>, %43, %cst_33 [1] : vector<8x32xf32> to vector<8xf32>
      %45 = vector.shape_cast %44 : vector<8xf32> to vector<8x1xf32>
      %cst_34 = arith.constant 3.200000e+01 : f32
      %46 = vector.broadcast %cst_34 : f32 to vector<8x1xf32>
      %47 = arith.divf %45, %46 : vector<8x1xf32>
      %48 = vector.broadcast %40 : vector<8x1xf32> to vector<8x32xf32>
      %49 = arith.subf %34, %48 : vector<8x32xf32>
      %cst_35 = arith.constant 9.99999974E-6 : f32
      %50 = vector.broadcast %cst_35 : f32 to vector<8x1xf32>
      %51 = arith.addf %47, %50 : vector<8x1xf32>
      %52 = math.rsqrt %51 : vector<8x1xf32>
      %53 = vector.broadcast %52 : vector<8x1xf32> to vector<8x32xf32>
      %54 = arith.mulf %49, %53 : vector<8x32xf32>
      %55 = vector.broadcast %35 : vector<1x32xf32> to vector<8x32xf32>
      %56 = arith.mulf %54, %55 : vector<8x32xf32>
      %57 = vector.broadcast %36 : vector<1x32xf32> to vector<8x32xf32>
      %58 = arith.addf %56, %57 : vector<8x32xf32>
      %c0_36 = arith.constant 0 : index
      %c0_37 = arith.constant 0 : index
      %59 = vector.load %arg11[%c0_36, %c0_37] : memref<8x32xf32, #tpu.memory_space<vmem>>, vector<8x32xf32>
      tpu.vector_store %arg11[%c0_36, %c0_37], %58 {strides = array<i32>} : memref<8x32xf32, #tpu.memory_space<vmem>>, vector<8x32xf32>,
    } else {
    }
    %c0 = arith.constant 0 : index
    %c0_1 = arith.constant 0 : index
    %3 = vector.load %arg11[%c0, %c0_1] : memref<8x32xf32, #tpu.memory_space<vmem>>, vector<8x32xf32>
    %4 = arith.truncf %3 : vector<8x32xf32> to vector<8x32xbf16>
    %c0_2 = arith.constant 0 : index
    %c0_3 = arith.constant 0 : index
    %c0_4 = arith.constant 0 : index
    %5 = vector.load %arg6[%c0_2, %c0_3, %c0_4] : memref<1x32x8xbf16, #tpu.memory_space<vmem>>, vector<1x32x8xbf16>
    %6 = vector.shape_cast %5 : vector<1x32x8xbf16> to vector<32x8xbf16>
    %cst = arith.constant dense<0.000000e+00> : vector<8x8xf32>
    %7 = tpu.matmul %4, %6, %cst {dimension_numbers = #tpu.dot_dimension_numbers<[1], [0], [0], [1], [0, 0, 1, 1], [], []>} : vector<8x32xbf16>, vector<32x8xbf16>, vector<8x8xf32> -> vector<8x8xf32>
    %c0_5 = arith.constant 0 : index
    %c0_6 = arith.constant 0 : index
    %c0_7 = arith.constant 0 : index
    %8 = vector.load %arg7[%c0_5, %c0_6, %c0_7] : memref<1x32x8xbf16, #tpu.memory_space<vmem>>, vector<1x32x8xbf16>
    %9 = vector.shape_cast %8 : vector<1x32x8xbf16> to vector<32x8xbf16>
    %cst_8 = arith.constant dense<0.000000e+00> : vector<8x8xf32>
    %10 = tpu.matmul %4, %9, %cst_8 {dimension_numbers = #tpu.dot_dimension_numbers<[1], [0], [0], [1], [0, 0, 1, 1], [], []>} : vector<8x32xbf16>, vector<32x8xbf16>, vector<8x8xf32> -> vector<8x8xf32>
    %11 = arith.mulf %7, %7 : vector<8x8xf32>
    %cst_9 = arith.constant dense<0.000000e+00> : vector<8xf32>
    %12 = vector.multi_reduction <add>, %11, %cst_9 [1] : vector<8x8xf32> to vector<8xf32>
    %13 = vector.shape_cast %12 : vector<8xf32> to vector<8x1xf32>
    %cst_10 = arith.constant 9.99999996E-13 : f32
    %14 = vector.broadcast %cst_10 : f32 to vector<8x1xf32>
    %15 = arith.maximumf %13, %14 : vector<8x1xf32>
    %16 = math.rsqrt %15 : vector<8x1xf32>
    %cst_11 = arith.constant 0.353553385 : f32
    %17 = vector.broadcast %cst_11 : f32 to vector<8x8xf32>
    %18 = arith.mulf %7, %17 : vector<8x8xf32>
    %19 = arith.truncf %18 : vector<8x8xf32> to vector<8x8xbf16>
    %c0_12 = arith.constant 0 : index
    %c0_13 = arith.constant 0 : index
    %c0_14 = arith.constant 0 : index
    %c0_15 = arith.constant 0 : index
    %20 = vector.load %arg8[%c0_12, %c0_13, %c0_14, %c0_15] : memref<1x1x8x8xbf16, #tpu.memory_space<vmem>>, vector<1x1x8x8xbf16>
    %21 = vector.shape_cast %20 : vector<1x1x8x8xbf16> to vector<8x8xbf16>
    %22 = vector.shape_cast %19 : vector<8x8xbf16> to vector<1x1x8x8xbf16>
    tpu.vector_store %arg8[%c0_12, %c0_13, %c0_14, %c0_15], %22 {strides = array<i32>} : memref<1x1x8x8xbf16, #tpu.memory_space<vmem>>, vector<1x1x8x8xbf16>,
    %23 = vector.broadcast %16 : vector<8x1xf32> to vector<8x8xf32>
    %24 = arith.mulf %7, %23 : vector<8x8xf32>
    %25 = arith.truncf %24 : vector<8x8xf32> to vector<8x8xbf16>
    %c0_16 = arith.constant 0 : index
    %c0_17 = arith.constant 0 : index
    %c0_18 = arith.constant 0 : index
    %c0_19 = arith.constant 0 : index
    %26 = vector.load %arg9[%c0_16, %c0_17, %c0_18, %c0_19] : memref<1x1x8x8xbf16, #tpu.memory_space<vmem>>, vector<1x1x8x8xbf16>
    %27 = vector.shape_cast %26 : vector<1x1x8x8xbf16> to vector<8x8xbf16>
    %28 = vector.shape_cast %25 : vector<8x8xbf16> to vector<1x1x8x8xbf16>
    tpu.vector_store %arg9[%c0_16, %c0_17, %c0_18, %c0_19], %28 {strides = array<i32>} : memref<1x1x8x8xbf16, #tpu.memory_space<vmem>>, vector<1x1x8x8xbf16>,
    %29 = arith.truncf %10 : vector<8x8xf32> to vector<8x8xbf16>
    %c0_20 = arith.constant 0 : index
    %c0_21 = arith.constant 0 : index
    %c0_22 = arith.constant 0 : index
    %c0_23 = arith.constant 0 : index
    %30 = vector.load %arg10[%c0_20, %c0_21, %c0_22, %c0_23] : memref<1x1x8x8xbf16, #tpu.memory_space<vmem>>, vector<1x1x8x8xbf16>
    %31 = vector.shape_cast %30 : vector<1x1x8x8xbf16> to vector<8x8xbf16>
    %32 = vector.shape_cast %29 : vector<8x8xbf16> to vector<1x1x8x8xbf16>
    tpu.vector_store %arg10[%c0_20, %c0_21, %c0_22, %c0_23], %32 {strides = array<i32>} : memref<1x1x8x8xbf16, #tpu.memory_space<vmem>>, vector<1x1x8x8xbf16>,
    return
  }
  func.func @transform_0(%arg0: i32, %arg1: i32, %arg2: i32) -> (i32, i32, i32) {
    %c0_i32 = arith.constant 0 : i32
    %c0_i32_0 = arith.constant 0 : i32
    return %arg0, %arg1, %c0_i32 : i32, i32, i32
  }
  func.func @transform_1(%arg0: i32, %arg1: i32, %arg2: i32) -> (i32, i32) {
    %c0_i32 = arith.constant 0 : i32
    %c0_i32_0 = arith.constant 0 : i32
    %c0_i32_1 = arith.constant 0 : i32
    return %c0_i32, %c0_i32_0 : i32, i32
  }
  func.func @transform_2(%arg0: i32, %arg1: i32, %arg2: i32) -> (i32, i32) {
    %c0_i32 = arith.constant 0 : i32
    %c0_i32_0 = arith.constant 0 : i32
    %c0_i32_1 = arith.constant 0 : i32
    return %c0_i32, %c0_i32_0 : i32, i32
  }
  func.func @transform_3(%arg0: i32, %arg1: i32, %arg2: i32) -> (i32, i32, i32) {
    %c0_i32 = arith.constant 0 : i32
    %c0_i32_0 = arith.constant 0 : i32
    %c0_i32_1 = arith.constant 0 : i32
    return %arg2, %c0_i32, %c0_i32_0 : i32, i32, i32
  }
  func.func @transform_4(%arg0: i32, %arg1: i32, %arg2: i32) -> (i32, i32, i32) {
    %c0_i32 = arith.constant 0 : i32
    %c0_i32_0 = arith.constant 0 : i32
    %c0_i32_1 = arith.constant 0 : i32
    return %arg2, %c0_i32, %c0_i32_0 : i32, i32, i32
  }
  func.func @transform_5(%arg0: i32, %arg1: i32, %arg2: i32) -> (i32, i32, i32, i32) {
    %c0_i32 = arith.constant 0 : i32
    %c0_i32_0 = arith.constant 0 : i32
    return %arg0, %arg2, %arg1, %c0_i32 : i32, i32, i32, i32
  }
  func.func @transform_6(%arg0: i32, %arg1: i32, %arg2: i32) -> (i32, i32, i32, i32) {
    %c0_i32 = arith.constant 0 : i32
    %c0_i32_0 = arith.constant 0 : i32
    return %arg0, %arg2, %arg1, %c0_i32 : i32, i32, i32, i32
  }
  func.func @transform_7(%arg0: i32, %arg1: i32, %arg2: i32) -> (i32, i32, i32, i32) {
    %c0_i32 = arith.constant 0 : i32
    %c0_i32_0 = arith.constant 0 : i32
    return %arg0, %arg2, %arg1, %c0_i32 : i32, i32, i32, i32
  }
}

</mosaic_0001>

<llo_original>
// kernel: tpu_custom_call.1
$region0: #{tpu_custom_call.1}
  #allocation0 [shape = 'u32[]', space=smem, size = 0x4, offset = 0x4, fixed_abs, tag = 'smem constant byte address 0x4 - core index']
  #allocation1 [shape = 'u32[144,128]{1,0:T(1,128)}', space=vmem, size = 0x12000, scoped, tag = 'internal scratch']
  #allocation2 [shape = 'f32[8,32]{1,0:T(8,128)}', space=vmem, size = 0x1000, scoped, tag = 'scratch operand']
  %s0 = inlined_call_operand.vmem [shape: f32[2,8,32], index: 0, kind: input, shape index: {}]
  %s1 = inlined_call_operand.vmem [shape: f32[1,32], index: 1, kind: input, shape index: {}]
  %s2 = inlined_call_operand.vmem [shape: f32[1,32], index: 2, kind: input, shape index: {}]
  %s3 = inlined_call_operand.vmem [shape: bf16[4,32,8], index: 3, kind: input, shape index: {}]
  %s4 = inlined_call_operand.vmem [shape: bf16[4,32,8], index: 4, kind: input, shape index: {}]
  %s5 = inlined_call_operand.hbm [shape: bf16[2,4,8,8], index: 5, kind: output, shape index: {0}]
  %s6 = inlined_call_operand.hbm [shape: bf16[2,4,8,8], index: 6, kind: output, shape index: {1}]
  %s7 = inlined_call_operand.hbm [shape: bf16[2,4,8,8], index: 7, kind: output, shape index: {2}]
  %8 = xla_tuple %s5, %s6, %s7
  %s9 = sld [smem:[#allocation0]]
  $region73: #{tpu_custom_call.1} parent=0
    _
  %s11 = ssub.s32 1, %s9
  %s12 = scalar_select 0, %s11, %s9
  $region1: #{tpu_custom_call.1} parent=0
    #allocation3 [shape = 'u8[4096]{0}', space=vmem, size = 0x1000, scoped, tag = 'output window, operand 0']
    #allocation4 [shape = 's32[2]{0}', space=sflag, size = 0x8, scoped, tag = 'scoped memory for tpu_custom_call.1']
    #allocation5 [shape = 'u8[4096]{0}', space=vmem, size = 0x1000, scoped, tag = 'output window, operand 1']
    #allocation6 [shape = 's32[2]{0}', space=sflag, size = 0x8, scoped, tag = 'scoped memory for tpu_custom_call.1']
    #allocation7 [shape = 'u8[4096]{0}', space=vmem, size = 0x1000, scoped, tag = 'output window, operand 2']
    %13 = vsyncpa [#allocation4], 0
    %s14 = scalar_lea.sflag [#allocation4], 1
    %15 = vsyncpa %s14, 0
    %16 = vsyncpa [#allocation6], 0
    %s17 = scalar_lea.sflag [#allocation6], 1
    %18 = vsyncpa %s17, 0
    loop: start=0, step=1, limit=10
    $region2: #{tpu_custom_call.1} parent=1 // loop_pre_header
      _
    $region3: #{tpu_custom_call.1} parent=1 // loop_header
      %s20 = sphi 0, %s24
      %p21 = scmp.ge.s32.totalorder %s20, 10
      %s27 = sphi 0, %s46
      %s28 = sphi 0, %s42
      %s29 = sphi 0, %s38
      %s30 = sphi 0, %s27
      %s31 = sphi 0, %s28
      %s32 = sphi 0, %s29
      %s33 = sphi 0, %s30
      %s34 = sphi 0, %s31
      %s35 = sphi 0, %s32
      %s51 = sphi 0, %s53
      %s54 = sphi 0, %s51
      %s55 = sphi 0, %s54
      %s71 = sphi 0, %s55
      %s75 = sphi 0, %s75
      %s77 = sphi 0, %s75
      %s78 = sphi 0, %s77
      %s92 = sphi 0, %s78
      %s96 = sphi 0, %s96
      %s98 = sphi 0, %s96
      %s99 = sphi 0, %s98
      %s113 = sphi 0, %s99
      %s119 = sphi 0, %s121
      %s122 = sphi 0, %s119
      %s123 = sphi 0, %s122
      %s139 = sphi 0, %s123
      %s145 = sphi 0, %s147
      %s148 = sphi 0, %s145
      %s149 = sphi 0, %s148
      %s165 = sphi 0, %s149
      %s175 = sphi 0, %s177
      %s178 = sphi 0, %s175
      %s179 = sphi 0, %s178
      %s195 = sphi 0, %s179
      %s205 = sphi 0, %s207
      %s208 = sphi 0, %s205
      %s209 = sphi 0, %s208
      %s225 = sphi 0, %s209
      %s235 = sphi 0, %s237
      %s238 = sphi 0, %s235
      %s239 = sphi 0, %s238
      %s255 = sphi 0, %s239
    $region4: #{tpu_custom_call.1} parent=1 // loop_header_branch
      %23 = sbr.rel (%p21) target = $region8
    $region5: #{tpu_custom_call.1} parent=1 // loop_body
      %s25 = ssub.s32 %s20, 1
      %s26 = ssub.s32 %s20, 2
      %s36 = sadd.s32 1, %s29
      %p37 = scmp.ge.s32.totalorder %s36, 4
      %s38 = scalar_select %p37, 0, %s36
      %s39 = sadd.s32 1, %s28
      %s40 = scalar_select %p37, %s39, %s28
      %p41 = scmp.ge.s32.totalorder %s40, 1
      %s42 = scalar_select %p41, 0, %s40
      %s43 = sadd.s32 1, %s27
      %s44 = scalar_select %p41, %s43, %s27
      %p45 = scmp.ge.s32.totalorder %s44, 2
      %s46 = scalar_select %p45, 0, %s44
      %s47 = ssub.s32 %s27, %s46
      %s48 = ssub.s32 %s28, %s42
      %s49 = sor.u32 %s47, %s48
      %p50 = scmp.eq.s32.totalorder %s49, 0
      %s52 = sadd.s32 %s51, 1
      %s53 = scalar_select %p50, %s51, %s52
      %p56 = pneg %p50
      %p57 = scmp.eq.s32.totalorder %s20, 7
      %p58 = por %p56, %p57
      %p59 = scmp.ne.s32.totalorder %s51, %s54
      %p60 = scmp.eq.s32.totalorder %s20, 0
      %p61 = por %p59, %p60
      %p62 = scmp.ne.s32.totalorder %s51, %s54
      %p63 = scmp.eq.s32.totalorder %s25, 7
      %p64 = por %p62, %p63
      %p65 = scmp.ne.s32.totalorder %s54, %s55
      %p66 = scmp.eq.s32.totalorder %s25, 0
      %p67 = por %p65, %p66
      %p68 = scmp.ne.s32.totalorder %s54, %s55
      %p69 = scmp.eq.s32.totalorder %s26, 7
      %p70 = por %p68, %p69
      %p72 = scmp.ne.s32.totalorder %s55, %s71
      %p73 = scmp.eq.s32.totalorder %s26, 0
      %p74 = por %p72, %p73
      %s76 = sadd.s32 %s75, 1
      %p79 = scmp.eq.s32.totalorder %s20, 7
      %p80 = scmp.ne.s32.totalorder %s75, %s77
      %p81 = scmp.eq.s32.totalorder %s20, 0
      %p82 = por %p80, %p81
      %p83 = scmp.ne.s32.totalorder %s75, %s77
      %p84 = scmp.eq.s32.totalorder %s25, 7
      %p85 = por %p83, %p84
      %p86 = scmp.ne.s32.totalorder %s77, %s78
      %p87 = scmp.eq.s32.totalorder %s25, 0
      %p88 = por %p86, %p87
      %p89 = scmp.ne.s32.totalorder %s77, %s78
      %p90 = scmp.eq.s32.totalorder %s26, 7
      %p91 = por %p89, %p90
      %p93 = scmp.ne.s32.totalorder %s78, %s92
      %p94 = scmp.eq.s32.totalorder %s26, 0
      %p95 = por %p93, %p94
      %s97 = sadd.s32 %s96, 1
      %p100 = scmp.eq.s32.totalorder %s20, 7
      %p101 = scmp.ne.s32.totalorder %s96, %s98
      %p102 = scmp.eq.s32.totalorder %s20, 0
      %p103 = por %p101, %p102
      %p104 = scmp.ne.s32.totalorder %s96, %s98
      %p105 = scmp.eq.s32.totalorder %s25, 7
      %p106 = por %p104, %p105
      %p107 = scmp.ne.s32.totalorder %s98, %s99
      %p108 = scmp.eq.s32.totalorder %s25, 0
      %p109 = por %p107, %p108
      %p110 = scmp.ne.s32.totalorder %s98, %s99
      %p111 = scmp.eq.s32.totalorder %s26, 7
      %p112 = por %p110, %p111
      %p114 = scmp.ne.s32.totalorder %s99, %s113
      %p115 = scmp.eq.s32.totalorder %s26, 0
      %p116 = por %p114, %p115
      %s117 = ssub.s32 %s29, %s38
      %p118 = scmp.eq.s32.totalorder %s117, 0
      %s120 = sadd.s32 %s119, 1
      %s121 = scalar_select %p118, %s119, %s120
      %p124 = pneg %p118
      %p125 = scmp.eq.s32.totalorder %s20, 7
      %p126 = por %p124, %p125
      %p127 = scmp.ne.s32.totalorder %s119, %s122
      %p128 = scmp.eq.s32.totalorder %s20, 0
      %p129 = por %p127, %p128
      %p130 = scmp.ne.s32.totalorder %s119, %s122
      %p131 = scmp.eq.s32.totalorder %s25, 7
      %p132 = por %p130, %p131
      %p133 = scmp.ne.s32.totalorder %s122, %s123
      %p134 = scmp.eq.s32.totalorder %s25, 0
      %p135 = por %p133, %p134
      %p136 = scmp.ne.s32.totalorder %s122, %s123
      %p137 = scmp.eq.s32.totalorder %s26, 7
      %p138 = por %p136, %p137
      %p140 = scmp.ne.s32.totalorder %s123, %s139
      %p141 = scmp.eq.s32.totalorder %s26, 0
      %p142 = por %p140, %p141
      %s143 = ssub.s32 %s29, %s38
      %p144 = scmp.eq.s32.totalorder %s143, 0
      %s146 = sadd.s32 %s145, 1
      %s147 = scalar_select %p144, %s145, %s146
      %p150 = pneg %p144
      %p151 = scmp.eq.s32.totalorder %s20, 7
      %p152 = por %p150, %p151
      %p153 = scmp.ne.s32.totalorder %s145, %s148
      %p154 = scmp.eq.s32.totalorder %s20, 0
      %p155 = por %p153, %p154
      %p156 = scmp.ne.s32.totalorder %s145, %s148
      %p157 = scmp.eq.s32.totalorder %s25, 7
      %p158 = por %p156, %p157
      %p159 = scmp.ne.s32.totalorder %s148, %s149
      %p160 = scmp.eq.s32.totalorder %s25, 0
      %p161 = por %p159, %p160
      %p162 = scmp.ne.s32.totalorder %s148, %s149
      %p163 = scmp.eq.s32.totalorder %s26, 7
      %p164 = por %p162, %p163
      %p166 = scmp.ne.s32.totalorder %s149, %s165
      %p167 = scmp.eq.s32.totalorder %s26, 0
      %p168 = por %p166, %p167
      %s169 = ssub.s32 %s27, %s46
      %s170 = ssub.s32 %s29, %s38
      %s171 = sor.u32 %s169, %s170
      %s172 = ssub.s32 %s28, %s42
      %s173 = sor.u32 %s171, %s172
      %p174 = scmp.eq.s32.totalorder %s173, 0
      %s176 = sadd.s32 %s175, 1
      %s177 = scalar_select %p174, %s175, %s176
      %p180 = pneg %p174
      %p181 = scmp.eq.s32.totalorder %s20, 7
      %p182 = por %p180, %p181
      %p183 = scmp.ne.s32.totalorder %s175, %s178
      %p184 = scmp.eq.s32.totalorder %s20, 0
      %p185 = por %p183, %p184
      %p186 = scmp.ne.s32.totalorder %s175, %s178
      %p187 = scmp.eq.s32.totalorder %s25, 7
      %p188 = por %p186, %p187
      %p189 = scmp.ne.s32.totalorder %s178, %s179
      %p190 = scmp.eq.s32.totalorder %s25, 0
      %p191 = por %p189, %p190
      %p192 = scmp.ne.s32.totalorder %s178, %s179
      %p193 = scmp.eq.s32.totalorder %s26, 7
      %p194 = por %p192, %p193
      %p196 = scmp.ne.s32.totalorder %s179, %s195
      %p197 = scmp.eq.s32.totalorder %s26, 0
      %p198 = por %p196, %p197
      %s199 = ssub.s32 %s27, %s46
      %s200 = ssub.s32 %s29, %s38
      %s201 = sor.u32 %s199, %s200
      %s202 = ssub.s32 %s28, %s42
      %s203 = sor.u32 %s201, %s202
      %p204 = scmp.eq.s32.totalorder %s203, 0
      %s206 = sadd.s32 %s205, 1
      %s207 = scalar_select %p204, %s205, %s206
      %p210 = pneg %p204
      %p211 = scmp.eq.s32.totalorder %s20, 7
      %p212 = por %p210, %p211
      %p213 = scmp.ne.s32.totalorder %s205, %s208
      %p214 = scmp.eq.s32.totalorder %s20, 0
      %p215 = por %p213, %p214
      %p216 = scmp.ne.s32.totalorder %s205, %s208
      %p217 = scmp.eq.s32.totalorder %s25, 7
      %p218 = por %p216, %p217
      %p219 = scmp.ne.s32.totalorder %s208, %s209
      %p220 = scmp.eq.s32.totalorder %s25, 0
      %p221 = por %p219, %p220
      %p222 = scmp.ne.s32.totalorder %s208, %s209
      %p223 = scmp.eq.s32.totalorder %s26, 7
      %p224 = por %p222, %p223
      %p226 = scmp.ne.s32.totalorder %s209, %s225
      %p227 = scmp.eq.s32.totalorder %s26, 0
      %p228 = por %p226, %p227
      %s229 = ssub.s32 %s27, %s46
      %s230 = ssub.s32 %s29, %s38
      %s231 = sor.u32 %s229, %s230
      %s232 = ssub.s32 %s28, %s42
      %s233 = sor.u32 %s231, %s232
      %p234 = scmp.eq.s32.totalorder %s233, 0
      %s236 = sadd.s32 %s235, 1
      %s237 = scalar_select %p234, %s235, %s236
      %p240 = pneg %p234
      %p241 = scmp.eq.s32.totalorder %s20, 7
      %p242 = por %p240, %p241
      %p243 = scmp.ne.s32.totalorder %s235, %s238
      %p244 = scmp.eq.s32.totalorder %s20, 0
      %p245 = por %p243, %p244
      %p246 = scmp.ne.s32.totalorder %s235, %s238
      %p247 = scmp.eq.s32.totalorder %s25, 7
      %p248 = por %p246, %p247
      %p249 = scmp.ne.s32.totalorder %s238, %s239
      %p250 = scmp.eq.s32.totalorder %s25, 0
      %p251 = por %p249, %p250
      %p252 = scmp.ne.s32.totalorder %s238, %s239
      %p253 = scmp.eq.s32.totalorder %s26, 7
      %p254 = por %p252, %p253
      %p256 = scmp.ne.s32.totalorder %s239, %s255
      %p257 = scmp.eq.s32.totalorder %s26, 0
      %p258 = por %p256, %p257
      %p259 = scmp.le.s32.totalorder 1, %s20
      %p260 = scmp.lt.s32.totalorder %s20, 9
      %p261 = pnand %p259, %p260
      %p262 = pneg %p261
      // Predicated region
      $region9: #{tpu_custom_call.1} parent=5 // pred_check
        _
      $region10: #{tpu_custom_call.1} parent=5 // pred_check_branch
        %264 = sbr.rel (%p261) target = $region12
      $region11: #{tpu_custom_call.1} parent=5 // pred_region
        %s265 = ssub.s32 %s20, 1
        // Predicated region
        $region13: #{tpu_custom_call.1} parent=11 // pred_check
          %p266 = pneg %p88
        $region14: #{tpu_custom_call.1} parent=11 // pred_check_branch
          %268 = sbr.rel (%p266) target = $region16
        $region15: #{tpu_custom_call.1} parent=11 // pred_region
          _
        $region16: #{tpu_custom_call.1} parent=11 // pred_fallthru
          _
        // Predicated region
        $region17: #{tpu_custom_call.1} parent=11 // pred_check
          %p269 = pneg %p109
        $region18: #{tpu_custom_call.1} parent=11 // pred_check_branch
          %271 = sbr.rel (%p269) target = $region20
        $region19: #{tpu_custom_call.1} parent=11 // pred_region
          _
        $region20: #{tpu_custom_call.1} parent=11 // pred_fallthru
          _
      $region12: #{tpu_custom_call.1} parent=5 // pred_fallthru
        _
      %p272 = scmp.lt.s32.totalorder %s20, 8
      // Predicated region
      $region21: #{tpu_custom_call.1} parent=5 // pred_check
        %p273 = pneg %p272
      $region22: #{tpu_custom_call.1} parent=5 // pred_check_branch
        %275 = sbr.rel (%p273) target = $region24
      $region23: #{tpu_custom_call.1} parent=5 // pred_region
        // Predicated region
        $region25: #{tpu_custom_call.1} parent=23 // pred_check
          %p276 = pneg %p61
        $region26: #{tpu_custom_call.1} parent=23 // pred_check_branch
          %278 = sbr.rel (%p276) target = $region28
        $region27: #{tpu_custom_call.1} parent=23 // pred_region
          %p279 = scmp.lt.s32.totalorder %s27, 1
          %s280 = scalar_select %p279, %s27, 1
          %p281 = scmp.lt.s32.totalorder %s28, 0
          %s282 = scalar_select %p281, %s28, 0
          %s283 = sadd.s32 %s282, %s280
          %s284 = smul.addr %s283, 8
          %s285 = scalar_lea.vmem %s0, %s284
        $region28: #{tpu_custom_call.1} parent=23 // pred_fallthru
          _
        // Predicated region
        $region29: #{tpu_custom_call.1} parent=23 // pred_check
          %p286 = pneg %p129
        $region30: #{tpu_custom_call.1} parent=23 // pred_check_branch
          %288 = sbr.rel (%p286) target = $region32
        $region31: #{tpu_custom_call.1} parent=23 // pred_region
          %p289 = scmp.lt.s32.totalorder %s29, 3
          %s290 = scalar_select %p289, %s29, 3
          %s291 = smul.addr %s290, 4
          %s292 = smul.addr %s291, 4
          %s293 = scalar_lea.vmem %s3, %s292
        $region32: #{tpu_custom_call.1} parent=23 // pred_fallthru
          _
        // Predicated region
        $region33: #{tpu_custom_call.1} parent=23 // pred_check
          %p294 = pneg %p155
        $region34: #{tpu_custom_call.1} parent=23 // pred_check_branch
          %296 = sbr.rel (%p294) target = $region36
        $region35: #{tpu_custom_call.1} parent=23 // pred_region
          %p297 = scmp.lt.s32.totalorder %s29, 3
          %s298 = scalar_select %p297, %s29, 3
          %s299 = smul.addr %s298, 4
          %s300 = smul.addr %s299, 4
          %s301 = scalar_lea.vmem %s4, %s300
        $region36: #{tpu_custom_call.1} parent=23 // pred_fallthru
          _
      $region24: #{tpu_custom_call.1} parent=5 // pred_fallthru
        _
      %p302 = scmp.le.s32.totalorder 1, %s20
      %p303 = scmp.lt.s32.totalorder %s20, 9
      %p304 = pnand %p302, %p303
      %p305 = pneg %p304
      // Predicated region
      $region37: #{tpu_custom_call.1} parent=5 // pred_check
        _
      $region38: #{tpu_custom_call.1} parent=5 // pred_check_branch
        %307 = sbr.rel (%p304) target = $region40
      $region39: #{tpu_custom_call.1} parent=5 // pred_region
        %s308 = ssub.s32 %s20, 1
        %p309 = scmp.lt.s32.totalorder %s30, 1
        %s310 = scalar_select %p309, %s30, 1
        %p311 = scmp.lt.s32.totalorder %s31, 0
        %s312 = scalar_select %p311, %s31, 0
        %s313 = sadd.s32 %s312, %s310
        %s314 = smul.addr %s313, 8
        %s315 = scalar_lea.vmem %s0, %s314
        %p316 = pneg %p67
        %p317 = pneg %p64
        %p318 = pneg %p88
        %p319 = pneg %p85
        %p320 = pneg %p109
        %p321 = pneg %p106
        %p322 = scmp.lt.s32.totalorder %s32, 3
        %s323 = scalar_select %p322, %s32, 3
        %s324 = smul.addr %s323, 4
        %s325 = smul.addr %s324, 4
        %s326 = scalar_lea.vmem %s3, %s325
        %p327 = pneg %p135
        %p328 = pneg %p132
        %p329 = scmp.lt.s32.totalorder %s32, 3
        %s330 = scalar_select %p329, %s32, 3
        %s331 = smul.addr %s330, 4
        %s332 = smul.addr %s331, 4
        %s333 = scalar_lea.vmem %s4, %s332
        %p334 = pneg %p161
        %p335 = pneg %p158
        %p336 = pneg %p191
        %p337 = pneg %p188
        %s338 = sand.u32 %s178, 1
        %s339 = scalar_lea.sflag [#allocation4], %s338
        %s340 = sand.u32 %s178, 1
        %s341 = smul.addr %s340, 4
        %s342 = scalar_lea.vmem [#allocation3], %s341
        %p343 = pneg %p221
        %p344 = pneg %p218
        %s345 = sand.u32 %s25, 1
        %s346 = scalar_lea.sflag [#allocation6], %s345
        %s347 = sand.u32 %s208, 1
        %s348 = smul.addr %s347, 4
        %s349 = scalar_lea.vmem [#allocation5], %s348
        %p350 = pneg %p251
        %p351 = pneg %p248
        %s352 = sand.u32 %s25, 1
        %s353 = scalar_lea.sflag [#allocation6], %s352
        %s354 = sand.u32 %s238, 1
        %s355 = smul.addr %s354, 4
        %s356 = scalar_lea.vmem [#allocation7], %s355
        %p357 = scmp.lt.s32.totalorder %s30, 1
        %s358 = scalar_select %p357, %s30, 1
        %p359 = scmp.lt.s32.totalorder %s31, 0
        %s360 = scalar_select %p359, %s31, 0
        %s361 = sadd.s32 %s360, %s358
        %s362 = smul.addr %s361, 8
        %s363 = scalar_lea.vmem %s0, %s362
        %p364 = scmp.lt.s32.totalorder %s32, 3
        %s365 = scalar_select %p364, %s32, 3
        %s366 = smul.addr %s365, 4
        %s367 = smul.addr %s366, 4
        %s368 = scalar_lea.vmem %s3, %s367
        %p369 = scmp.lt.s32.totalorder %s32, 3
        %s370 = scalar_select %p369, %s32, 3
        %s371 = smul.addr %s370, 4
        %s372 = smul.addr %s371, 4
        %s373 = scalar_lea.vmem %s4, %s372
        %p375 = scmp.eq.s32.totalorder %s32, 0
        // Predicated region
        $region41: #{tpu_custom_call.1} parent=39 // pred_check
          %p376 = pneg %p375
        $region42: #{tpu_custom_call.1} parent=39 // pred_check_branch
          %378 = sbr.rel (%p376) target = $region44
        $region43: #{tpu_custom_call.1} parent=39 // pred_region
          %v379 = vld [vmem:[%s363] sm:$0xff]
          %v380 = vld [vmem:[%s1] sm:$0x1]
          %v381 = vld [vmem:[%s2] sm:$0x1]
          %vm382 = vcmask 261120
          %v383 = vsel %vm382, %v379, 0.0
          %384 = vadd.xlane.f32.xlu0 %v383
          %v385 = vpop.xlane.xlu0 %384
          %v386 = vrcp.pop 32.0
          %v387 = vmul.f32 %v385, %v386
          %v388 = vsub.f32 %v379, %v387
          %v389 = vmul.f32 %v388, %v388
          %v390 = vsel %vm382, %v389, 0.0
          %391 = vadd.xlane.f32.xlu0 %v390
          %v392 = vpop.xlane.xlu0 %391
          %v393 = vmul.f32 %v392, %v386
          %v394 = vadd.f32 %v393, 1e-05
          %v395 = vrsqrt.pop %v394
          %v396 = vmul.f32 %v388, %v395
          %v398 = vlaneseq
          %v399 = vshrl.u32 %v398, 7
          %v400 = vsub.s32 0, %v399
          %v401 = vrot.slane %v380, %v400
          %v403 = vmul.f32 %v396, %v401
          %v405 = vlaneseq
          %v406 = vshrl.u32 %v405, 7
          %v407 = vsub.s32 0, %v406
          %v408 = vrot.slane %v381, %v407
          %v410 = vadd.f32 %v403, %v408
          %411 = vst.msk [vmem:[#allocation2] sm:$0xff] %vm382, %v410
        $region44: #{tpu_custom_call.1} parent=39 // pred_fallthru
          _
        %v412 = vld [vmem:[#allocation2] sm:$0xff]
        %v413 = vpack.c.bf16 %v412, %v412
        %v414 = vld [vmem:[%s368] sm:$0xf]
        %v415 = vld [vmem:[%s368 + $0x4] sm:$0xf]
        %v416 = vld [vmem:[%s368 + $0x8] sm:$0xf]
        %v417 = vld [vmem:[%s368 + $0xc] sm:$0xf]
        %v422 = vunpack.c.l.b16 %v414
        %v423 = vunpack.c.l.b16 %v415
        %v424 = vunpack.c.l.b16 %v416
        %v425 = vunpack.c.l.b16 %v417
        %v426 = vpack.c.b16 %v423, %v422
        %v427 = vpack.c.b16 %v425, %v424
        %vm430 = vcmask 261120
        %v432 = vsel %vm430, %v413, 0
        %434 = vmatprep.subr.bf16.mxu0 0
        %435 = vmatpush1.bf16.msra.mxu0 0
        %436 = vmatprep.subr.bf16.mxu0 0
        %437 = vmatpush1.bf16.msra.mxu0 0
        %438 = vmatprep.subr.bf16.mxu0 0
        %439 = vmatpush1.bf16.msra.mxu0 0
        %440 = vmatprep.subr.bf16.mxu0 0
        %441 = vmatpush1.bf16.msra.mxu0 0
        %442 = vmatprep.subr.bf16.mxu0 0
        %443 = vmatpush1.bf16.msra.mxu0 0
        %444 = vmatprep.subr.bf16.mxu0 0
        %445 = vmatpush1.bf16.msra.mxu0 0
        %446 = vmatprep.subr.bf16.mxu0 0
        %447 = vmatpush1.bf16.msra.mxu0 %v427
        %448 = vmatprep.subr.bf16.mxu0 0
        %449 = vmatpush1.bf16.msra.mxu0 %v426
        %450 = vmatprep.subr.bf16.mxu0 0
        %451 = vmatpush2.bf16.msra.mxu0 0
        %452 = vmatprep.subr.bf16.mxu0 0
        %453 = vmatpush2.bf16.msra.mxu0 0
        %454 = vmatprep.subr.bf16.mxu0 0
        %455 = vmatpush2.bf16.msra.mxu0 0
        %456 = vmatprep.subr.bf16.mxu0 0
        %457 = vmatpush2.bf16.msra.mxu0 0
        %458 = vmatprep.subr.bf16.mxu0 0
        %459 = vmatpush2.bf16.msra.mxu0 0
        %460 = vmatprep.subr.bf16.mxu0 0
        %461 = vmatpush2.bf16.msra.mxu0 0
        %462 = vmatprep.subr.bf16.mxu0 0
        %463 = vmatpush2.bf16.msra.mxu0 0
        %464 = vmatprep.subr.bf16.mxu0 0
        %465 = vmatpush2.bf16.msra.mxu0 0
        %466 = vmatprep.mubr.bf16.mxu0 0
        %467 = vmatmul.mubr.bf16.gmra.mxu0 %v432
        %v468 = vpop.f32.mrf.mxu0
        %v469 = vadd.f32 0.0, %v468
        %v470 = vpop.f32.mrf.mxu0
        %v471 = vpop.f32.mrf.mxu0
        %v472 = vpop.f32.mrf.mxu0
        %473 = vdwg.mxu0
        %v474 = vld [vmem:[%s373] sm:$0xf]
        %v475 = vld [vmem:[%s373 + $0x4] sm:$0xf]
        %v476 = vld [vmem:[%s373 + $0x8] sm:$0xf]
        %v477 = vld [vmem:[%s373 + $0xc] sm:$0xf]
        %v482 = vunpack.c.l.b16 %v474
        %v483 = vunpack.c.l.b16 %v475
        %v484 = vunpack.c.l.b16 %v476
        %v485 = vunpack.c.l.b16 %v477
        %v486 = vpack.c.b16 %v483, %v482
        %v487 = vpack.c.b16 %v485, %v484
        %490 = vmatprep.subr.bf16.mxu0 0
        %491 = vmatpush1.bf16.msra.mxu0 0
        %492 = vmatprep.subr.bf16.mxu0 0
        %493 = vmatpush1.bf16.msra.mxu0 0
        %494 = vmatprep.subr.bf16.mxu0 0
        %495 = vmatpush1.bf16.msra.mxu0 0
        %496 = vmatprep.subr.bf16.mxu0 0
        %497 = vmatpush1.bf16.msra.mxu0 0
        %498 = vmatprep.subr.bf16.mxu0 0
        %499 = vmatpush1.bf16.msra.mxu0 0
        %500 = vmatprep.subr.bf16.mxu0 0
        %501 = vmatpush1.bf16.msra.mxu0 0
        %502 = vmatprep.subr.bf16.mxu0 0
        %503 = vmatpush1.bf16.msra.mxu0 %v487
        %504 = vmatprep.subr.bf16.mxu0 0
        %505 = vmatpush1.bf16.msra.mxu0 %v486
        %506 = vmatprep.subr.bf16.mxu0 0
        %507 = vmatpush2.bf16.msra.mxu0 0
        %508 = vmatprep.subr.bf16.mxu0 0
        %509 = vmatpush2.bf16.msra.mxu0 0
        %510 = vmatprep.subr.bf16.mxu0 0
        %511 = vmatpush2.bf16.msra.mxu0 0
        %512 = vmatprep.subr.bf16.mxu0 0
        %513 = vmatpush2.bf16.msra.mxu0 0
        %514 = vmatprep.subr.bf16.mxu0 0
        %515 = vmatpush2.bf16.msra.mxu0 0
        %516 = vmatprep.subr.bf16.mxu0 0
        %517 = vmatpush2.bf16.msra.mxu0 0
        %518 = vmatprep.subr.bf16.mxu0 0
        %519 = vmatpush2.bf16.msra.mxu0 0
        %520 = vmatprep.subr.bf16.mxu0 0
        %521 = vmatpush2.bf16.msra.mxu0 0
        %522 = vmatprep.mubr.bf16.mxu0 0
        %523 = vmatmul.mubr.bf16.gmra.mxu0 %v432
        %v524 = vpop.f32.mrf.mxu0
        %v525 = vadd.f32 0.0, %v524
        %v526 = vpop.f32.mrf.mxu0
        %v527 = vpop.f32.mrf.mxu0
        %v528 = vpop.f32.mrf.mxu0
        %529 = vdwg.mxu0
        %v530 = vmul.f32 %v469, %v469
        %vm531 = vcmask 64512
        %v532 = vsel %vm531, %v530, 0.0
        %533 = vadd.xlane.f32.xlu0 %v532
        %v534 = vpop.xlane.xlu0 %533
        %v535 = vmax.f32 %v534, 1e-12
        %v536 = vrsqrt.pop %v535
        %v537 = vmul.f32 %v469, 0.35355338
        %v538 = vpack.c.bf16 %v537, %v537
        %vm539 = vcmask 60416
        %540 = vst.msk [vmem:[%s342] sm:$0xf] %vm539, %v538
        %v541 = vmul.f32 %v469, %v536
        %v542 = vpack.c.bf16 %v541, %v541
        %543 = vst.msk [vmem:[%s349] sm:$0xf] %vm539, %v542
        %v544 = vpack.c.bf16 %v525, %v525
        %545 = vst.msk [vmem:[%s356] sm:$0xf] %vm539, %v544
        %s546 = sand.u32 %s178, 1
        %s547 = scalar_lea.sflag [#allocation4], %s546
        %s548 = sand.u32 %s178, 1
        %s549 = smul.addr %s548, 4
        %s550 = scalar_lea.vmem [#allocation3], %s549
        %s551 = sand.u32 %s25, 1
        %s552 = scalar_lea.sflag [#allocation6], %s551
        %s553 = sand.u32 %s208, 1
        %s554 = smul.addr %s553, 4
        %s555 = scalar_lea.vmem [#allocation5], %s554
        %s556 = sand.u32 %s25, 1
        %s557 = scalar_lea.sflag [#allocation6], %s556
        %s558 = sand.u32 %s238, 1
        %s559 = smul.addr %s558, 4
        %s560 = scalar_lea.vmem [#allocation7], %s559
        // Predicated region
        $region45: #{tpu_custom_call.1} parent=39 // pred_check
          %p561 = pneg %p188
        $region46: #{tpu_custom_call.1} parent=39 // pred_check_branch
          %563 = sbr.rel (%p561) target = $region48
        $region47: #{tpu_custom_call.1} parent=39 // pred_region
          %s565 = ssub.s32 64, 64
          %566 = vsyncadd %s547, %s565
          %s567 = sadd.s32 %s31, %s32
          %s568 = smul.addr %s30, 4
          %s569 = sadd.s32 %s567, %s568
          %s570 = smul.addr %s569, 64
          %s571 = scalar_lea.hbm %s5, %s570
          %s573 = sshll.u32 %s550, 4
          %s574 = int_to_ptr.vmem [resolvable:$true] %s573
          %576 = dma.vmem_to_hbm [thread:$0]  %s574, 64, %s571, %s547
        $region48: #{tpu_custom_call.1} parent=39 // pred_fallthru
          _
        // Predicated region
        $region49: #{tpu_custom_call.1} parent=39 // pred_check
          %p577 = pneg %p218
        $region50: #{tpu_custom_call.1} parent=39 // pred_check_branch
          %579 = sbr.rel (%p577) target = $region52
        $region51: #{tpu_custom_call.1} parent=39 // pred_region
          %s581 = ssub.s32 64, 64
          %582 = vsyncadd %s552, %s581
          %s583 = sadd.s32 %s31, %s32
          %s584 = smul.addr %s30, 4
          %s585 = sadd.s32 %s583, %s584
          %s586 = smul.addr %s585, 64
          %s587 = scalar_lea.hbm %s6, %s586
          %s589 = sshll.u32 %s555, 4
          %s590 = int_to_ptr.vmem [resolvable:$true] %s589
          %592 = dma.vmem_to_hbm [thread:$0]  %s590, 64, %s587, %s552
        $region52: #{tpu_custom_call.1} parent=39 // pred_fallthru
          _
        // Predicated region
        $region53: #{tpu_custom_call.1} parent=39 // pred_check
          %p593 = pneg %p248
        $region54: #{tpu_custom_call.1} parent=39 // pred_check_branch
          %595 = sbr.rel (%p593) target = $region56
        $region55: #{tpu_custom_call.1} parent=39 // pred_region
          %s597 = ssub.s32 64, 64
          %598 = vsyncadd %s557, %s597
          %s599 = sadd.s32 %s31, %s32
          %s600 = smul.addr %s30, 4
          %s601 = sadd.s32 %s599, %s600
          %s602 = smul.addr %s601, 64
          %s603 = scalar_lea.hbm %s7, %s602
          %s605 = sshll.u32 %s560, 4
          %s606 = int_to_ptr.vmem [resolvable:$true] %s605
          %608 = dma.vmem_to_hbm [thread:$0]  %s606, 64, %s603, %s557
        $region56: #{tpu_custom_call.1} parent=39 // pred_fallthru
          _
      $region40: #{tpu_custom_call.1} parent=5 // pred_fallthru
        _
      %p609 = scmp.le.s32.totalorder 2, %s20
      // Predicated region
      $region57: #{tpu_custom_call.1} parent=5 // pred_check
        %p610 = pneg %p609
      $region58: #{tpu_custom_call.1} parent=5 // pred_check_branch
        %612 = sbr.rel (%p610) target = $region60
      $region59: #{tpu_custom_call.1} parent=5 // pred_region
        %s613 = ssub.s32 %s20, 2
        // Predicated region
        $region61: #{tpu_custom_call.1} parent=59 // pred_check
          %p614 = pneg %p194
        $region62: #{tpu_custom_call.1} parent=59 // pred_check_branch
          %616 = sbr.rel (%p614) target = $region64
        $region63: #{tpu_custom_call.1} parent=59 // pred_region
          %s617 = sand.u32 %s179, 1
          %s618 = scalar_lea.sflag [#allocation4], %s617
          %s619 = sand.u32 %s179, 1
          %s620 = smul.addr %s619, 4
          %s621 = scalar_lea.vmem [#allocation3], %s620
          %622 = dma.done %s618, 64
        $region64: #{tpu_custom_call.1} parent=59 // pred_fallthru
          _
        // Predicated region
        $region65: #{tpu_custom_call.1} parent=59 // pred_check
          %p623 = pneg %p224
        $region66: #{tpu_custom_call.1} parent=59 // pred_check_branch
          %625 = sbr.rel (%p623) target = $region68
        $region67: #{tpu_custom_call.1} parent=59 // pred_region
          %s626 = sand.u32 %s26, 1
          %s627 = scalar_lea.sflag [#allocation6], %s626
          %s628 = sand.u32 %s209, 1
          %s629 = smul.addr %s628, 4
          %s630 = scalar_lea.vmem [#allocation5], %s629
          %631 = dma.done %s627, 64
        $region68: #{tpu_custom_call.1} parent=59 // pred_fallthru
          _
        // Predicated region
        $region69: #{tpu_custom_call.1} parent=59 // pred_check
          %p632 = pneg %p254
        $region70: #{tpu_custom_call.1} parent=59 // pred_check_branch
          %634 = sbr.rel (%p632) target = $region72
        $region71: #{tpu_custom_call.1} parent=59 // pred_region
          %s635 = sand.u32 %s26, 1
          %s636 = scalar_lea.sflag [#allocation6], %s635
          %s637 = sand.u32 %s239, 1
          %s638 = smul.addr %s637, 4
          %s639 = scalar_lea.vmem [#allocation7], %s638
          %640 = dma.done %s636, 64
        $region72: #{tpu_custom_call.1} parent=59 // pred_fallthru
          _
      $region60: #{tpu_custom_call.1} parent=5 // pred_fallthru
        _
    $region6: #{tpu_custom_call.1} parent=1 // loop_footer
      %s24 = sadd.s32 1, %s20
    $region7: #{tpu_custom_call.1} parent=1 // loop_footer_branch
      %19 = sbr.rel target = $region3
    $region8: #{tpu_custom_call.1} parent=1 // loop_exit
      _
    %641 = vsyncpa [#allocation4], 1
    %s642 = scalar_lea.sflag [#allocation4], 1
    %643 = vsyncpa %s642, 1
    %644 = vsyncpa [#allocation6], 1
    %s645 = scalar_lea.sflag [#allocation6], 1
    %646 = vsyncpa %s645, 1

</llo_original>
